<compile_context>
chip_gen: v7x
topology: tpu7x:2x2x1
jax: 0.10.0
libtpu: 0.0.40
codegen_flags: <defaults>
</compile_context>

<pallas_src>
import jax
import jax.numpy as jnp
from jax.experimental import pallas as pl
from jax.experimental.pallas import tpu as pltpu

LAYERS = [2, 100, 100, 100, 100, 2]
LANE = 128          # hidden feature dims padded to lane width
OUT_COLS = 8        # layer-4 output padded to 8 cols (true width 2)
SUB = 8             # f32 sublane granularity
BLOCK_ROWS = 2048   # batch rows per grid step (amortizes per-step overhead)


def _mlp_kernel(x_ref, w0_ref, wh_ref, w4_ref, b012_ref, b4_ref, o_ref):
    """One batch block of the whole MLP; all weights are VMEM-resident."""
    x2 = x_ref[...]            # (block, 2)        f32 -- true-width input
    w0 = w0_ref[...]           # (2, 128)          f32
    b = b012_ref[...]          # (3, 128)          f32 -- biases of layers 0, 1, 2

    # Layer 0 (in=2): tiny contraction -> VPU broadcast multiply-adds instead of
    # wasting an MXU pass with 2/128 useful rows.
    y = x2[:, 0:1] * w0[0:1, :] + x2[:, 1:2] * w0[1:2, :] + b[0:1, :]
    y = jnp.tanh(y)

    # Hidden layers 1, 2 with tanh.  linears[3] intentionally unused, matching
    # the PyTorch forward loop.  bf16 MXU inputs, f32 accumulation, f32 tanh.
    for j in range(2):
        z = jnp.dot(y.astype(jnp.bfloat16), wh_ref[j],
                    preferred_element_type=jnp.float32)
        y = jnp.tanh(z + b[j + 1:j + 2, :])

    # Final layer = linears[4], no activation.  Only 8 output columns are
    # computed/stored (true width 2), so the HBM writeback is 32 B/row.
    z = jnp.dot(y.astype(jnp.bfloat16), w4_ref[...],
                preferred_element_type=jnp.float32)
    o_ref[...] = z + b4_ref[...]


def _pad2d(a, rows, cols):
    r, c = a.shape
    return jnp.pad(a, ((0, rows - r), (0, cols - c)))


def _round_up(a, m):
    return ((a + m - 1) // m) * m


def init_params(key, layers):
    """Xavier-normal weights (gain=1), zero biases — same as the PyTorch __init__."""
    params = []
    for i in range(len(layers) - 1):
        fan_in, fan_out = layers[i], layers[i + 1]
        key, sub = jax.random.split(key)
        std = (2.0 / (fan_in + fan_out)) ** 0.5
        # PyTorch weight is (out, in); store transposed (in, out) for x @ W_t.
        w_t = std * jax.random.normal(sub, (fan_in, fan_out), dtype=jnp.float32)
        b = jnp.zeros((fan_out,), dtype=jnp.float32)
        params.append((w_t, b))
    return params


def prepare_params(params):
    """Pad / pack / cast the weights ONCE (hoisted out of the per-call path).

    Returns:
      w0_p  : (2, 128)       f32  -- layer 0 (K=2), used on the VPU.
      wh_p  : (2, 128, 128)  bf16 -- layers 1 and 2, MXU.
      w4_p  : (128, 8)       bf16 -- layer 4 (output), padded to 8 cols only.
      b012_p: (3, 128)       f32  -- biases of layers 0, 1, 2.
      b4_p  : (1, 8)         f32  -- bias of layer 4.
    """
    w0_p = _pad2d(params[0][0], LAYERS[0], LANE)
    wh_p = jnp.stack([_pad2d(params[i][0], LANE, LANE) for i in (1, 2)]
                     ).astype(jnp.bfloat16)
    w4_p = _pad2d(params[4][0], LANE, OUT_COLS).astype(jnp.bfloat16)
    b012_p = jnp.stack([_pad2d(params[i][1].reshape(1, -1), 1, LANE)[0]
                        for i in (0, 1, 2)])
    b4_p = _pad2d(params[4][1].reshape(1, -1), 1, OUT_COLS)
    return w0_p, wh_p, w4_p, b012_p, b4_p


@jax.jit
def mlp_forward(x, w0_p, wh_p, w4_p, b012_p, b4_p):
    """x: [N, 2] float32 -> [N, 2] float32, via the Pallas kernel."""
    n, d_in = x.shape

    # Row-block selection: big blocks to amortize per-step overhead, but always
    # try for >= 2 grid steps so the "parallel" axis can span both v7x cores.
    n8 = _round_up(n, SUB)
    block = min(BLOCK_ROWS, n8)
    if n8 // block < 2 and block > SUB:
        block = max(SUB, _round_up(block // 2, SUB))
    n_pad = _round_up(n8, block)
    grid = (n_pad // block,)

    xp = jnp.pad(x, ((0, n_pad - n), (0, 0)))   # keep true last dim of 2

    flops = n_pad * (2 * d_in * LANE + 2 * 2 * LANE * LANE + 2 * LANE * OUT_COLS)
    transcendentals = n_pad * 3 * LANE
    bytes_accessed = (xp.size * 4 + w0_p.size * 4 + wh_p.size * 2 + w4_p.size * 2
                      + b012_p.size * 4 + b4_p.size * 4 + n_pad * OUT_COLS * 4)

    out_pad = pl.pallas_call(
        _mlp_kernel,
        out_shape=jax.ShapeDtypeStruct((n_pad, OUT_COLS), jnp.float32),
        grid=grid,
        in_specs=[
            pl.BlockSpec((block, d_in), lambda i: (i, 0)),        # x: streamed
            pl.BlockSpec((LAYERS[0], LANE), lambda i: (0, 0)),    # w0: resident
            pl.BlockSpec((2, LANE, LANE), lambda i: (0, 0, 0)),   # hidden W: resident
            pl.BlockSpec((LANE, OUT_COLS), lambda i: (0, 0)),     # w4: resident
            pl.BlockSpec((3, LANE), lambda i: (0, 0)),            # biases 0-2
            pl.BlockSpec((1, OUT_COLS), lambda i: (0, 0)),        # bias 4
        ],
        out_specs=pl.BlockSpec((block, OUT_COLS), lambda i: (i, 0)),
        compiler_params=pltpu.CompilerParams(
            dimension_semantics=("parallel",)),
        cost_estimate=pl.CostEstimate(
            flops=int(flops),
            transcendentals=int(transcendentals),
            bytes_accessed=int(bytes_accessed)),
    )(xp, w0_p, wh_p, w4_p, b012_p, b4_p)

    return out_pad[:n, :LAYERS[-1]]


def mlp_reference_f32(x, params):
    """Pure-f32 JAX reference reproducing the exact PyTorch control flow."""
    y = x
    for i in range(len(params) - 2):      # layers 0..2, with tanh
        w_t, b = params[i]
        y = jnp.tanh(y @ w_t + b)
    w_t, b = params[-1]                   # layer 4, no activation (layer 3 skipped)
    return y @ w_t + b


def mlp_reference_mixed(x, params):
    """Reference mirroring the kernel's precision policy (bf16 MXU, f32 elsewhere)."""
    w_t, b = params[0]
    y = jnp.tanh(x @ w_t + b)             # layer 0 stays f32 (VPU in the kernel)
    for i in (1, 2):
        w_t, b = params[i]
        y = jnp.tanh(jnp.dot(y.astype(jnp.bfloat16), w_t.astype(jnp.bfloat16),
                             preferred_element_type=jnp.float32) + b)
    w_t, b = params[4]
    return jnp.dot(y.astype(jnp.bfloat16), w_t.astype(jnp.bfloat16),
                   preferred_element_type=jnp.float32) + b


if __name__ == "__main__":
    key = jax.random.PRNGKey(0)
    pkey, xkey = jax.random.split(key)

    params = init_params(pkey, LAYERS)
    packed = prepare_params(params)

    # 256 evaluation points with 2 input features each (mirrors the original
    # script's Nx = 256 grid of (x, t)-style inputs).
    N = 256
    x = jax.random.uniform(xkey, (N, LAYERS[0]), dtype=jnp.float32,
                           minval=-5.0, maxval=5.0)

    out = jax.block_until_ready(mlp_forward(x, *packed))
    assert out.shape == (N, LAYERS[-1]), out.shape

    ref_mixed = mlp_reference_mixed(x, params)
    ref_f32 = mlp_reference_f32(x, params)
    err_mixed = float(jnp.max(jnp.abs(out - ref_mixed)))
    err_f32 = float(jnp.max(jnp.abs(out - ref_f32)))
    assert jnp.allclose(out, ref_mixed, atol=5e-3, rtol=5e-3), (
        f"mixed-precision mismatch: max abs err = {err_mixed}")
    assert jnp.allclose(out, ref_f32, atol=1e-1, rtol=1e-1), (
        f"f32 drift too large: max abs err = {err_f32}")

    print("KERNEL_OK")
</pallas_src>

<mosaic_0001>
module attributes {stable_mosaic.version = 11 : i64} {
  func.func @_mlp_kernel(%arg0: i32, %arg1: memref<128x2xf32, #tpu.memory_space<vmem>>, %arg2: memref<2x128xf32, #tpu.memory_space<vmem>>, %arg3: memref<2x128x128xbf16, #tpu.memory_space<vmem>>, %arg4: memref<128x8xbf16, #tpu.memory_space<vmem>>, %arg5: memref<3x128xf32, #tpu.memory_space<vmem>>, %arg6: memref<1x8xf32, #tpu.memory_space<vmem>>, %arg7: memref<128x8xf32, #tpu.memory_space<vmem>>) attributes {dimension_semantics = [#tpu.dimension_semantics<parallel>], iteration_bounds = array<i64: 2>, scalar_prefetch = 0 : i64, scratch_operands = 0 : i64, tpu.core_type = #tpu.core_type<tc>, window_params = [{transform_indices = @transform_0, window_bounds = array<i64: 128, 2>}, {pipeline_mode = #tpu.pipeline_mode<synchronous>, transform_indices = @transform_1, window_bounds = array<i64: 2, 128>}, {pipeline_mode = #tpu.pipeline_mode<synchronous>, transform_indices = @transform_2, window_bounds = array<i64: 2, 128, 128>}, {pipeline_mode = #tpu.pipeline_mode<synchronous>, transform_indices = @transform_3, window_bounds = array<i64: 128, 8>}, {pipeline_mode = #tpu.pipeline_mode<synchronous>, transform_indices = @transform_4, window_bounds = array<i64: 3, 128>}, {pipeline_mode = #tpu.pipeline_mode<synchronous>, transform_indices = @transform_5, window_bounds = array<i64: 1, 8>}, {transform_indices = @transform_6, window_bounds = array<i64: 128, 8>}]} {
    %c0 = arith.constant 0 : index
    %c0_0 = arith.constant 0 : index
    %0 = vector.load %arg1[%c0, %c0_0] : memref<128x2xf32, #tpu.memory_space<vmem>>, vector<128x2xf32>
    %c0_1 = arith.constant 0 : index
    %c0_2 = arith.constant 0 : index
    %1 = vector.load %arg2[%c0_1, %c0_2] : memref<2x128xf32, #tpu.memory_space<vmem>>, vector<2x128xf32>
    %c0_3 = arith.constant 0 : index
    %c0_4 = arith.constant 0 : index
    %2 = vector.load %arg5[%c0_3, %c0_4] : memref<3x128xf32, #tpu.memory_space<vmem>>, vector<3x128xf32>
    %3 = vector.extract_strided_slice %0 {offsets = [0, 0], sizes = [128, 1], strides = [1, 1]} : vector<128x2xf32> to vector<128x1xf32>
    %4 = vector.extract_strided_slice %1 {offsets = [0, 0], sizes = [1, 128], strides = [1, 1]} : vector<2x128xf32> to vector<1x128xf32>
    %5 = vector.broadcast %3 : vector<128x1xf32> to vector<128x128xf32>
    %6 = vector.broadcast %4 : vector<1x128xf32> to vector<128x128xf32>
    %7 = arith.mulf %5, %6 : vector<128x128xf32>
    %8 = vector.extract_strided_slice %0 {offsets = [0, 1], sizes = [128, 1], strides = [1, 1]} : vector<128x2xf32> to vector<128x1xf32>
    %9 = vector.extract_strided_slice %1 {offsets = [1, 0], sizes = [1, 128], strides = [1, 1]} : vector<2x128xf32> to vector<1x128xf32>
    %10 = vector.broadcast %8 : vector<128x1xf32> to vector<128x128xf32>
    %11 = vector.broadcast %9 : vector<1x128xf32> to vector<128x128xf32>
    %12 = arith.mulf %10, %11 : vector<128x128xf32>
    %13 = arith.addf %7, %12 : vector<128x128xf32>
    %14 = vector.extract_strided_slice %2 {offsets = [0, 0], sizes = [1, 128], strides = [1, 1]} : vector<3x128xf32> to vector<1x128xf32>
    %15 = vector.broadcast %14 : vector<1x128xf32> to vector<128x128xf32>
    %16 = arith.addf %13, %15 : vector<128x128xf32>
    %17 = math.tanh %16 : vector<128x128xf32>
    %18 = arith.truncf %17 : vector<128x128xf32> to vector<128x128xbf16>
    %c0_5 = arith.constant 0 : index
    %c0_6 = arith.constant 0 : index
    %c0_7 = arith.constant 0 : index
    %19 = vector.load %arg3[%c0_5, %c0_6, %c0_7] : memref<2x128x128xbf16, #tpu.memory_space<vmem>>, vector<1x128x128xbf16>
    %20 = vector.shape_cast %19 : vector<1x128x128xbf16> to vector<128x128xbf16>
    %cst = arith.constant dense<0.000000e+00> : vector<128x128xf32>
    %21 = tpu.matmul %18, %20, %cst {dimension_numbers = #tpu.dot_dimension_numbers<[1], [0], [0], [1], [0, 0, 1, 1], [], []>} : vector<128x128xbf16>, vector<128x128xbf16>, vector<128x128xf32> -> vector<128x128xf32>
    %22 = vector.extract_strided_slice %2 {offsets = [1, 0], sizes = [1, 128], strides = [1, 1]} : vector<3x128xf32> to vector<1x128xf32>
    %23 = vector.broadcast %22 : vector<1x128xf32> to vector<128x128xf32>
    %24 = arith.addf %21, %23 : vector<128x128xf32>
    %25 = math.tanh %24 : vector<128x128xf32>
    %26 = arith.truncf %25 : vector<128x128xf32> to vector<128x128xbf16>
    %c1 = arith.constant 1 : index
    %c0_8 = arith.constant 0 : index
    %c0_9 = arith.constant 0 : index
    %27 = vector.load %arg3[%c1, %c0_8, %c0_9] : memref<2x128x128xbf16, #tpu.memory_space<vmem>>, vector<1x128x128xbf16>
    %28 = vector.shape_cast %27 : vector<1x128x128xbf16> to vector<128x128xbf16>
    %cst_10 = arith.constant dense<0.000000e+00> : vector<128x128xf32>
    %29 = tpu.matmul %26, %28, %cst_10 {dimension_numbers = #tpu.dot_dimension_numbers<[1], [0], [0], [1], [0, 0, 1, 1], [], []>} : vector<128x128xbf16>, vector<128x128xbf16>, vector<128x128xf32> -> vector<128x128xf32>
    %30 = vector.extract_strided_slice %2 {offsets = [2, 0], sizes = [1, 128], strides = [1, 1]} : vector<3x128xf32> to vector<1x128xf32>
    %31 = vector.broadcast %30 : vector<1x128xf32> to vector<128x128xf32>
    %32 = arith.addf %29, %31 : vector<128x128xf32>
    %33 = math.tanh %32 : vector<128x128xf32>
    %34 = arith.truncf %33 : vector<128x128xf32> to vector<128x128xbf16>
    %c0_11 = arith.constant 0 : index
    %c0_12 = arith.constant 0 : index
    %35 = vector.load %arg4[%c0_11, %c0_12] : memref<128x8xbf16, #tpu.memory_space<vmem>>, vector<128x8xbf16>
    %cst_13 = arith.constant dense<0.000000e+00> : vector<128x8xf32>
    %36 = tpu.matmul %34, %35, %cst_13 {dimension_numbers = #tpu.dot_dimension_numbers<[1], [0], [0], [1], [0, 0, 1, 1], [], []>} : vector<128x128xbf16>, vector<128x8xbf16>, vector<128x8xf32> -> vector<128x8xf32>
    %c0_14 = arith.constant 0 : index
    %c0_15 = arith.constant 0 : index
    %37 = vector.load %arg6[%c0_14, %c0_15] : memref<1x8xf32, #tpu.memory_space<vmem>>, vector<1x8xf32>
    %38 = vector.broadcast %37 : vector<1x8xf32> to vector<128x8xf32>
    %39 = arith.addf %36, %38 : vector<128x8xf32>
    %c0_16 = arith.constant 0 : index
    %c0_17 = arith.constant 0 : index
    %40 = vector.load %arg7[%c0_16, %c0_17] : memref<128x8xf32, #tpu.memory_space<vmem>>, vector<128x8xf32>
    tpu.vector_store %arg7[%c0_16, %c0_17], %39 {strides = array<i32>} : memref<128x8xf32, #tpu.memory_space<vmem>>, vector<128x8xf32>,
    return
  }
  func.func @transform_0(%arg0: i32) -> (i32, i32) {
    %c0_i32 = arith.constant 0 : i32
    %c0_i32_0 = arith.constant 0 : i32
    return %arg0, %c0_i32 : i32, i32
  }
  func.func @transform_1(%arg0: i32) -> (i32, i32) {
    %c0_i32 = arith.constant 0 : i32
    %c0_i32_0 = arith.constant 0 : i32
    %c0_i32_1 = arith.constant 0 : i32
    return %c0_i32, %c0_i32_0 : i32, i32
  }
  func.func @transform_2(%arg0: i32) -> (i32, i32, i32) {
    %c0_i32 = arith.constant 0 : i32
    %c0_i32_0 = arith.constant 0 : i32
    %c0_i32_1 = arith.constant 0 : i32
    %c0_i32_2 = arith.constant 0 : i32
    return %c0_i32, %c0_i32_0, %c0_i32_1 : i32, i32, i32
  }
  func.func @transform_3(%arg0: i32) -> (i32, i32) {
    %c0_i32 = arith.constant 0 : i32
    %c0_i32_0 = arith.constant 0 : i32
    %c0_i32_1 = arith.constant 0 : i32
    return %c0_i32, %c0_i32_0 : i32, i32
  }
  func.func @transform_4(%arg0: i32) -> (i32, i32) {
    %c0_i32 = arith.constant 0 : i32
    %c0_i32_0 = arith.constant 0 : i32
    %c0_i32_1 = arith.constant 0 : i32
    return %c0_i32, %c0_i32_0 : i32, i32
  }
  func.func @transform_5(%arg0: i32) -> (i32, i32) {
    %c0_i32 = arith.constant 0 : i32
    %c0_i32_0 = arith.constant 0 : i32
    %c0_i32_1 = arith.constant 0 : i32
    return %c0_i32, %c0_i32_0 : i32, i32
  }
  func.func @transform_6(%arg0: i32) -> (i32, i32) {
    %c0_i32 = arith.constant 0 : i32
    %c0_i32_0 = arith.constant 0 : i32
    return %arg0, %c0_i32 : i32, i32
  }
}

</mosaic_0001>

<llo_original>
// kernel: mlp_forward.1
$region0: #{mlp_forward.1}
  #allocation0 [shape = 'u32[]', space=smem, size = 0x4, offset = 0x4, fixed_abs, tag = 'smem constant byte address 0x4 - core index']
  #allocation1 [shape = 'u32[144,128]{1,0:T(1,128)}', space=vmem, size = 0x12000, scoped, tag = 'internal scratch']
  %s0 = inlined_call_operand.vmem [shape: f32[256,2], index: 0, kind: input, shape index: {}]
  %s1 = inlined_call_operand.vmem [shape: f32[2,128], index: 1, kind: input, shape index: {}]
  %s2 = inlined_call_operand.vmem [shape: bf16[2,128,128], index: 2, kind: input, shape index: {}]
  %s3 = inlined_call_operand.vmem [shape: bf16[128,8], index: 3, kind: input, shape index: {}]
  %s4 = inlined_call_operand.vmem [shape: f32[3,128], index: 4, kind: input, shape index: {}]
  %s5 = inlined_call_operand.vmem [shape: f32[1,8], index: 5, kind: input, shape index: {}]
  %s6 = inlined_call_operand.vmem [shape: f32[256,8], index: 6, kind: output, shape index: {}]
  %s7 = sld [smem:[#allocation0]]
  $region57: #{mlp_forward.1} parent=0
    _
  %s9 = ssub.s32 1, %s7
  %s10 = scalar_select 0, %s9, %s7
  loop: start=0, step=1, limit=4
  $region2: #{mlp_forward.1} parent=0 // loop_pre_header
    _
  $region3: #{mlp_forward.1} parent=0 // loop_header
    %s12 = sphi 0, %s16
    %p13 = scmp.ge.s32.totalorder %s12, 4
    %s22 = sphi 0, %s24
    %s25 = sphi 0, %s22
    %s26 = sphi 0, %s25
    %s42 = sphi 0, %s26
    %s46 = sphi 0, %s46
    %s48 = sphi 0, %s46
    %s49 = sphi 0, %s48
    %s63 = sphi 0, %s49
    %s67 = sphi 0, %s67
    %s69 = sphi 0, %s67
    %s70 = sphi 0, %s69
    %s84 = sphi 0, %s70
    %s88 = sphi 0, %s88
    %s90 = sphi 0, %s88
    %s91 = sphi 0, %s90
    %s105 = sphi 0, %s91
    %s109 = sphi 0, %s109
    %s111 = sphi 0, %s109
    %s112 = sphi 0, %s111
    %s126 = sphi 0, %s112
    %s130 = sphi 0, %s130
    %s132 = sphi 0, %s130
    %s133 = sphi 0, %s132
    %s147 = sphi 0, %s133
    %s153 = sphi 0, %s155
    %s156 = sphi 0, %s153
    %s157 = sphi 0, %s156
    %s173 = sphi 0, %s157
  $region4: #{mlp_forward.1} parent=0 // loop_header_branch
    %15 = sbr.rel (%p13) target = $region8
  $region5: #{mlp_forward.1} parent=0 // loop_body
    %s17 = ssub.s32 %s12, 1
    %s18 = ssub.s32 %s12, 2
    %s19 = sadd.s32 %s12, 1
    %s20 = ssub.s32 %s12, %s19
    %p21 = scmp.eq.s32.totalorder %s20, 0
    %s23 = sadd.s32 %s22, 1
    %s24 = scalar_select %p21, %s22, %s23
    %p27 = pneg %p21
    %p28 = scmp.eq.s32.totalorder %s12, 1
    %p29 = por %p27, %p28
    %p30 = scmp.ne.s32.totalorder %s22, %s25
    %p31 = scmp.eq.s32.totalorder %s12, 0
    %p32 = por %p30, %p31
    %p33 = scmp.ne.s32.totalorder %s22, %s25
    %p34 = scmp.eq.s32.totalorder %s17, 1
    %p35 = por %p33, %p34
    %p36 = scmp.ne.s32.totalorder %s25, %s26
    %p37 = scmp.eq.s32.totalorder %s17, 0
    %p38 = por %p36, %p37
    %p39 = scmp.ne.s32.totalorder %s25, %s26
    %p40 = scmp.eq.s32.totalorder %s18, 1
    %p41 = por %p39, %p40
    %p43 = scmp.ne.s32.totalorder %s26, %s42
    %p44 = scmp.eq.s32.totalorder %s18, 0
    %p45 = por %p43, %p44
    %s47 = sadd.s32 %s46, 1
    %p50 = scmp.eq.s32.totalorder %s12, 1
    %p51 = scmp.ne.s32.totalorder %s46, %s48
    %p52 = scmp.eq.s32.totalorder %s12, 0
    %p53 = por %p51, %p52
    %p54 = scmp.ne.s32.totalorder %s46, %s48
    %p55 = scmp.eq.s32.totalorder %s17, 1
    %p56 = por %p54, %p55
    %p57 = scmp.ne.s32.totalorder %s48, %s49
    %p58 = scmp.eq.s32.totalorder %s17, 0
    %p59 = por %p57, %p58
    %p60 = scmp.ne.s32.totalorder %s48, %s49
    %p61 = scmp.eq.s32.totalorder %s18, 1
    %p62 = por %p60, %p61
    %p64 = scmp.ne.s32.totalorder %s49, %s63
    %p65 = scmp.eq.s32.totalorder %s18, 0
    %p66 = por %p64, %p65
    %s68 = sadd.s32 %s67, 1
    %p71 = scmp.eq.s32.totalorder %s12, 1
    %p72 = scmp.ne.s32.totalorder %s67, %s69
    %p73 = scmp.eq.s32.totalorder %s12, 0
    %p74 = por %p72, %p73
    %p75 = scmp.ne.s32.totalorder %s67, %s69
    %p76 = scmp.eq.s32.totalorder %s17, 1
    %p77 = por %p75, %p76
    %p78 = scmp.ne.s32.totalorder %s69, %s70
    %p79 = scmp.eq.s32.totalorder %s17, 0
    %p80 = por %p78, %p79
    %p81 = scmp.ne.s32.totalorder %s69, %s70
    %p82 = scmp.eq.s32.totalorder %s18, 1
    %p83 = por %p81, %p82
    %p85 = scmp.ne.s32.totalorder %s70, %s84
    %p86 = scmp.eq.s32.totalorder %s18, 0
    %p87 = por %p85, %p86
    %s89 = sadd.s32 %s88, 1
    %p92 = scmp.eq.s32.totalorder %s12, 1
    %p93 = scmp.ne.s32.totalorder %s88, %s90
    %p94 = scmp.eq.s32.totalorder %s12, 0
    %p95 = por %p93, %p94
    %p96 = scmp.ne.s32.totalorder %s88, %s90
    %p97 = scmp.eq.s32.totalorder %s17, 1
    %p98 = por %p96, %p97
    %p99 = scmp.ne.s32.totalorder %s90, %s91
    %p100 = scmp.eq.s32.totalorder %s17, 0
    %p101 = por %p99, %p100
    %p102 = scmp.ne.s32.totalorder %s90, %s91
    %p103 = scmp.eq.s32.totalorder %s18, 1
    %p104 = por %p102, %p103
    %p106 = scmp.ne.s32.totalorder %s91, %s105
    %p107 = scmp.eq.s32.totalorder %s18, 0
    %p108 = por %p106, %p107
    %s110 = sadd.s32 %s109, 1
    %p113 = scmp.eq.s32.totalorder %s12, 1
    %p114 = scmp.ne.s32.totalorder %s109, %s111
    %p115 = scmp.eq.s32.totalorder %s12, 0
    %p116 = por %p114, %p115
    %p117 = scmp.ne.s32.totalorder %s109, %s111
    %p118 = scmp.eq.s32.totalorder %s17, 1
    %p119 = por %p117, %p118
    %p120 = scmp.ne.s32.totalorder %s111, %s112
    %p121 = scmp.eq.s32.totalorder %s17, 0
    %p122 = por %p120, %p121
    %p123 = scmp.ne.s32.totalorder %s111, %s112
    %p124 = scmp.eq.s32.totalorder %s18, 1
    %p125 = por %p123, %p124
    %p127 = scmp.ne.s32.totalorder %s112, %s126
    %p128 = scmp.eq.s32.totalorder %s18, 0
    %p129 = por %p127, %p128
    %s131 = sadd.s32 %s130, 1
    %p134 = scmp.eq.s32.totalorder %s12, 1
    %p135 = scmp.ne.s32.totalorder %s130, %s132
    %p136 = scmp.eq.s32.totalorder %s12, 0
    %p137 = por %p135, %p136
    %p138 = scmp.ne.s32.totalorder %s130, %s132
    %p139 = scmp.eq.s32.totalorder %s17, 1
    %p140 = por %p138, %p139
    %p141 = scmp.ne.s32.totalorder %s132, %s133
    %p142 = scmp.eq.s32.totalorder %s17, 0
    %p143 = por %p141, %p142
    %p144 = scmp.ne.s32.totalorder %s132, %s133
    %p145 = scmp.eq.s32.totalorder %s18, 1
    %p146 = por %p144, %p145
    %p148 = scmp.ne.s32.totalorder %s133, %s147
    %p149 = scmp.eq.s32.totalorder %s18, 0
    %p150 = por %p148, %p149
    %s151 = ssub.s32 %s12, %s19
    %p152 = scmp.eq.s32.totalorder %s151, 0
    %s154 = sadd.s32 %s153, 1
    %s155 = scalar_select %p152, %s153, %s154
    %p158 = pneg %p152
    %p159 = scmp.eq.s32.totalorder %s12, 1
    %p160 = por %p158, %p159
    %p161 = scmp.ne.s32.totalorder %s153, %s156
    %p162 = scmp.eq.s32.totalorder %s12, 0
    %p163 = por %p161, %p162
    %p164 = scmp.ne.s32.totalorder %s153, %s156
    %p165 = scmp.eq.s32.totalorder %s17, 1
    %p166 = por %p164, %p165
    %p167 = scmp.ne.s32.totalorder %s156, %s157
    %p168 = scmp.eq.s32.totalorder %s17, 0
    %p169 = por %p167, %p168
    %p170 = scmp.ne.s32.totalorder %s156, %s157
    %p171 = scmp.eq.s32.totalorder %s18, 1
    %p172 = por %p170, %p171
    %p174 = scmp.ne.s32.totalorder %s157, %s173
    %p175 = scmp.eq.s32.totalorder %s18, 0
    %p176 = por %p174, %p175
    %p177 = scmp.le.s32.totalorder 1, %s12
    %p178 = scmp.lt.s32.totalorder %s12, 3
    %p179 = pnand %p177, %p178
    %p180 = pneg %p179
    // Predicated region
    $region9: #{mlp_forward.1} parent=5 // pred_check
      _
    $region10: #{mlp_forward.1} parent=5 // pred_check_branch
      %182 = sbr.rel (%p179) target = $region12
    $region11: #{mlp_forward.1} parent=5 // pred_region
      %s183 = ssub.s32 %s12, 1
      // Predicated region
      $region13: #{mlp_forward.1} parent=11 // pred_check
        %p184 = pneg %p59
      $region14: #{mlp_forward.1} parent=11 // pred_check_branch
        %186 = sbr.rel (%p184) target = $region16
      $region15: #{mlp_forward.1} parent=11 // pred_region
        _
      $region16: #{mlp_forward.1} parent=11 // pred_fallthru
        _
      // Predicated region
      $region17: #{mlp_forward.1} parent=11 // pred_check
        %p187 = pneg %p80
      $region18: #{mlp_forward.1} parent=11 // pred_check_branch
        %189 = sbr.rel (%p187) target = $region20
      $region19: #{mlp_forward.1} parent=11 // pred_region
        _
      $region20: #{mlp_forward.1} parent=11 // pred_fallthru
        _
      // Predicated region
      $region21: #{mlp_forward.1} parent=11 // pred_check
        %p190 = pneg %p101
      $region22: #{mlp_forward.1} parent=11 // pred_check_branch
        %192 = sbr.rel (%p190) target = $region24
      $region23: #{mlp_forward.1} parent=11 // pred_region
        _
      $region24: #{mlp_forward.1} parent=11 // pred_fallthru
        _
      // Predicated region
      $region25: #{mlp_forward.1} parent=11 // pred_check
        %p193 = pneg %p122
      $region26: #{mlp_forward.1} parent=11 // pred_check_branch
        %195 = sbr.rel (%p193) target = $region28
      $region27: #{mlp_forward.1} parent=11 // pred_region
        _
      $region28: #{mlp_forward.1} parent=11 // pred_fallthru
        _
      // Predicated region
      $region29: #{mlp_forward.1} parent=11 // pred_check
        %p196 = pneg %p143
      $region30: #{mlp_forward.1} parent=11 // pred_check_branch
        %198 = sbr.rel (%p196) target = $region32
      $region31: #{mlp_forward.1} parent=11 // pred_region
        _
      $region32: #{mlp_forward.1} parent=11 // pred_fallthru
        _
    $region12: #{mlp_forward.1} parent=5 // pred_fallthru
      _
    %p199 = scmp.lt.s32.totalorder %s12, 2
    // Predicated region
    $region33: #{mlp_forward.1} parent=5 // pred_check
      %p200 = pneg %p199
    $region34: #{mlp_forward.1} parent=5 // pred_check_branch
      %202 = sbr.rel (%p200) target = $region36
    $region35: #{mlp_forward.1} parent=5 // pred_region
      // Predicated region
      $region37: #{mlp_forward.1} parent=35 // pred_check
        %p203 = pneg %p32
      $region38: #{mlp_forward.1} parent=35 // pred_check_branch
        %205 = sbr.rel (%p203) target = $region40
      $region39: #{mlp_forward.1} parent=35 // pred_region
        %s206 = smul.u32 16, %s12
        %p207 = scmp.lt.s32.totalorder %s206, 31
        %s208 = scalar_select %p207, %s206, 31
        %s209 = smul.addr %s208, 8
        %s210 = scalar_lea.vmem %s0, %s209
        %s211 = smul.u32 16, %s12
      $region40: #{mlp_forward.1} parent=35 // pred_fallthru
        _
    $region36: #{mlp_forward.1} parent=5 // pred_fallthru
      _
    %p212 = scmp.le.s32.totalorder 1, %s12
    %p213 = scmp.lt.s32.totalorder %s12, 3
    %p214 = pnand %p212, %p213
    %p215 = pneg %p214
    // Predicated region
    $region41: #{mlp_forward.1} parent=5 // pred_check
      _
    $region42: #{mlp_forward.1} parent=5 // pred_check_branch
      %217 = sbr.rel (%p214) target = $region44
    $region43: #{mlp_forward.1} parent=5 // pred_region
      %s218 = ssub.s32 %s12, 1
      %s219 = smul.u32 16, %s17
      %p220 = scmp.lt.s32.totalorder %s219, 31
      %s221 = scalar_select %p220, %s219, 31
      %s222 = smul.addr %s221, 8
      %s223 = scalar_lea.vmem %s0, %s222
      %p224 = pneg %p38
      %p225 = pneg %p35
      %p226 = pneg %p59
      %p227 = pneg %p56
      %p228 = pneg %p80
      %p229 = pneg %p77
      %p230 = pneg %p101
      %p231 = pneg %p98
      %p232 = pneg %p122
      %p233 = pneg %p119
      %p234 = pneg %p143
      %p235 = pneg %p140
      %p236 = pneg %p169
      %p237 = pneg %p166
      %s238 = smul.u32 16, %s17
      %p239 = scmp.lt.s32.totalorder %s238, 31
      %s240 = scalar_select %p239, %s238, 31
      %s241 = smul.addr %s240, 8
      %s242 = scalar_lea.vmem %s6, %s241
      %s243 = smul.u32 16, %s17
      %p244 = scmp.lt.s32.totalorder %s243, 31
      %s245 = scalar_select %p244, %s243, 31
      %s246 = smul.addr %s245, 8
      %s247 = scalar_lea.vmem %s0, %s246
      %s248 = smul.u32 16, %s17
      %s249 = smul.u32 16, %s17
      %p250 = scmp.lt.s32.totalorder %s249, 31
      %s251 = scalar_select %p250, %s249, 31
      %s252 = smul.addr %s251, 8
      %s253 = scalar_lea.vmem %s6, %s252
      %s254 = smul.u32 16, %s17
      %v256 = vld [vmem:[%s247] sm:$0xff]
      %v257 = vld [vmem:[%s247 + $0x8] sm:$0xff]
      %v258 = vld [vmem:[%s247 + $0x10] sm:$0xff]
      %v259 = vld [vmem:[%s247 + $0x18] sm:$0xff]
      %v260 = vld [vmem:[%s247 + $0x20] sm:$0xff]
      %v261 = vld [vmem:[%s247 + $0x28] sm:$0xff]
      %v262 = vld [vmem:[%s247 + $0x30] sm:$0xff]
      %v263 = vld [vmem:[%s247 + $0x38] sm:$0xff]
      %v264 = vld [vmem:[%s247 + $0x40] sm:$0xff]
      %v265 = vld [vmem:[%s247 + $0x48] sm:$0xff]
      %v266 = vld [vmem:[%s247 + $0x50] sm:$0xff]
      %v267 = vld [vmem:[%s247 + $0x58] sm:$0xff]
      %v268 = vld [vmem:[%s247 + $0x60] sm:$0xff]
      %v269 = vld [vmem:[%s247 + $0x68] sm:$0xff]
      %v270 = vld [vmem:[%s247 + $0x70] sm:$0xff]
      %v271 = vld [vmem:[%s247 + $0x78] sm:$0xff]
      %v272 = vld [vmem:[%s1] sm:$0x3]
      %v273 = vld [vmem:[%s4] sm:$0x7]
      %275 = vset.pattern.permute.xlu0 0
      %276 = vperm.xlu0 %275, %v256
      %v277 = vpop.permute.xlu0 %276
      %280 = vset.pattern.permute.xlu0 0
      %281 = vperm.xlu0 %280, %v257
      %v282 = vpop.permute.xlu0 %281
      %285 = vset.pattern.permute.xlu0 0
      %286 = vperm.xlu0 %285, %v258
      %v287 = vpop.permute.xlu0 %286
      %290 = vset.pattern.permute.xlu0 0
      %291 = vperm.xlu0 %290, %v259
      %v292 = vpop.permute.xlu0 %291
      %295 = vset.pattern.permute.xlu0 0
      %296 = vperm.xlu0 %295, %v260
      %v297 = vpop.permute.xlu0 %296
      %300 = vset.pattern.permute.xlu0 0
      %301 = vperm.xlu0 %300, %v261
      %v302 = vpop.permute.xlu0 %301
      %305 = vset.pattern.permute.xlu0 0
      %306 = vperm.xlu0 %305, %v262
      %v307 = vpop.permute.xlu0 %306
      %310 = vset.pattern.permute.xlu0 0
      %311 = vperm.xlu0 %310, %v263
      %v312 = vpop.permute.xlu0 %311
      %315 = vset.pattern.permute.xlu0 0
      %316 = vperm.xlu0 %315, %v264
      %v317 = vpop.permute.xlu0 %316
      %320 = vset.pattern.permute.xlu0 0
      %321 = vperm.xlu0 %320, %v265
      %v322 = vpop.permute.xlu0 %321
      %325 = vset.pattern.permute.xlu0 0
      %326 = vperm.xlu0 %325, %v266
      %v327 = vpop.permute.xlu0 %326
      %330 = vset.pattern.permute.xlu0 0
      %331 = vperm.xlu0 %330, %v267
      %v332 = vpop.permute.xlu0 %331
      %335 = vset.pattern.permute.xlu0 0
      %336 = vperm.xlu0 %335, %v268
      %v337 = vpop.permute.xlu0 %336
      %340 = vset.pattern.permute.xlu0 0
      %341 = vperm.xlu0 %340, %v269
      %v342 = vpop.permute.xlu0 %341
      %345 = vset.pattern.permute.xlu0 0
      %346 = vperm.xlu0 %345, %v270
      %v347 = vpop.permute.xlu0 %346
      %350 = vset.pattern.permute.xlu0 0
      %351 = vperm.xlu0 %350, %v271
      %v352 = vpop.permute.xlu0 %351
      %v354 = vlaneseq
      %v355 = vshrl.u32 %v354, 7
      %v356 = vsub.s32 0, %v355
      %v357 = vrot.slane %v272, %v356
      %v358 = vmul.f32 %v277, %v357
      %v359 = vmul.f32 %v282, %v357
      %v360 = vmul.f32 %v287, %v357
      %v361 = vmul.f32 %v292, %v357
      %v362 = vmul.f32 %v297, %v357
      %v363 = vmul.f32 %v302, %v357
      %v364 = vmul.f32 %v307, %v357
      %v365 = vmul.f32 %v312, %v357
      %v366 = vmul.f32 %v317, %v357
      %v367 = vmul.f32 %v322, %v357
      %v368 = vmul.f32 %v327, %v357
      %v369 = vmul.f32 %v332, %v357
      %v370 = vmul.f32 %v337, %v357
      %v371 = vmul.f32 %v342, %v357
      %v372 = vmul.f32 %v347, %v357
      %v373 = vmul.f32 %v352, %v357
      %374 = vset.pattern.permute.xlu0 1
      %375 = vperm.xlu0 %374, %v256
      %v376 = vpop.permute.xlu0 %375
      %378 = vset.pattern.permute.xlu0 1
      %379 = vperm.xlu0 %378, %v257
      %v380 = vpop.permute.xlu0 %379
      %382 = vset.pattern.permute.xlu0 1
      %383 = vperm.xlu0 %382, %v258
      %v384 = vpop.permute.xlu0 %383
      %386 = vset.pattern.permute.xlu0 1
      %387 = vperm.xlu0 %386, %v259
      %v388 = vpop.permute.xlu0 %387
      %390 = vset.pattern.permute.xlu0 1
      %391 = vperm.xlu0 %390, %v260
      %v392 = vpop.permute.xlu0 %391
      %394 = vset.pattern.permute.xlu0 1
      %395 = vperm.xlu0 %394, %v261
      %v396 = vpop.permute.xlu0 %395
      %398 = vset.pattern.permute.xlu0 1
      %399 = vperm.xlu0 %398, %v262
      %v400 = vpop.permute.xlu0 %399
      %402 = vset.pattern.permute.xlu0 1
      %403 = vperm.xlu0 %402, %v263
      %v404 = vpop.permute.xlu0 %403
      %406 = vset.pattern.permute.xlu0 1
      %407 = vperm.xlu0 %406, %v264
      %v408 = vpop.permute.xlu0 %407
      %410 = vset.pattern.permute.xlu0 1
      %411 = vperm.xlu0 %410, %v265
      %v412 = vpop.permute.xlu0 %411
      %414 = vset.pattern.permute.xlu0 1
      %415 = vperm.xlu0 %414, %v266
      %v416 = vpop.permute.xlu0 %415
      %418 = vset.pattern.permute.xlu0 1
      %419 = vperm.xlu0 %418, %v267
      %v420 = vpop.permute.xlu0 %419
      %422 = vset.pattern.permute.xlu0 1
      %423 = vperm.xlu0 %422, %v268
      %v424 = vpop.permute.xlu0 %423
      %426 = vset.pattern.permute.xlu0 1
      %427 = vperm.xlu0 %426, %v269
      %v428 = vpop.permute.xlu0 %427
      %430 = vset.pattern.permute.xlu0 1
      %431 = vperm.xlu0 %430, %v270
      %v432 = vpop.permute.xlu0 %431
      %434 = vset.pattern.permute.xlu0 1
      %435 = vperm.xlu0 %434, %v271
      %v436 = vpop.permute.xlu0 %435
      %v438 = vlaneseq
      %v439 = vshrl.u32 %v438, 7
      %v440 = vsub.s32 1, %v439
      %v441 = vrot.slane %v272, %v440
      %v442 = vmul.f32 %v376, %v441
      %v443 = vmul.f32 %v380, %v441
      %v444 = vmul.f32 %v384, %v441
      %v445 = vmul.f32 %v388, %v441
      %v446 = vmul.f32 %v392, %v441
      %v447 = vmul.f32 %v396, %v441
      %v448 = vmul.f32 %v400, %v441
      %v449 = vmul.f32 %v404, %v441
      %v450 = vmul.f32 %v408, %v441
      %v451 = vmul.f32 %v412, %v441
      %v452 = vmul.f32 %v416, %v441
      %v453 = vmul.f32 %v420, %v441
      %v454 = vmul.f32 %v424, %v441
      %v455 = vmul.f32 %v428, %v441
      %v456 = vmul.f32 %v432, %v441
      %v457 = vmul.f32 %v436, %v441
      %v458 = vadd.f32 %v358, %v442
      %v459 = vadd.f32 %v359, %v443
      %v460 = vadd.f32 %v360, %v444
      %v461 = vadd.f32 %v361, %v445
      %v462 = vadd.f32 %v362, %v446
      %v463 = vadd.f32 %v363, %v447
      %v464 = vadd.f32 %v364, %v448
      %v465 = vadd.f32 %v365, %v449
      %v466 = vadd.f32 %v366, %v450
      %v467 = vadd.f32 %v367, %v451
      %v468 = vadd.f32 %v368, %v452
      %v469 = vadd.f32 %v369, %v453
      %v470 = vadd.f32 %v370, %v454
      %v471 = vadd.f32 %v371, %v455
      %v472 = vadd.f32 %v372, %v456
      %v473 = vadd.f32 %v373, %v457
      %v474 = vlaneseq
      %v475 = vshrl.u32 %v474, 7
      %v476 = vsub.s32 0, %v475
      %v477 = vrot.slane %v273, %v476
      %v478 = vadd.f32 %v458, %v477
      %v479 = vadd.f32 %v459, %v477
      %v480 = vadd.f32 %v460, %v477
      %v481 = vadd.f32 %v461, %v477
      %v482 = vadd.f32 %v462, %v477
      %v483 = vadd.f32 %v463, %v477
      %v484 = vadd.f32 %v464, %v477
      %v485 = vadd.f32 %v465, %v477
      %v486 = vadd.f32 %v466, %v477
      %v487 = vadd.f32 %v467, %v477
      %v488 = vadd.f32 %v468, %v477
      %v489 = vadd.f32 %v469, %v477
      %v490 = vadd.f32 %v470, %v477
      %v491 = vadd.f32 %v471, %v477
      %v492 = vadd.f32 %v472, %v477
      %v493 = vadd.f32 %v473, %v477
      %v494 = vtanh.pop %v478
      %v495 = vtanh.pop %v479
      %v496 = vtanh.pop %v480
      %v497 = vtanh.pop %v481
      %v498 = vtanh.pop %v482
      %v499 = vtanh.pop %v483
      %v500 = vtanh.pop %v484
      %v501 = vtanh.pop %v485
      %v502 = vtanh.pop %v486
      %v503 = vtanh.pop %v487
      %v504 = vtanh.pop %v488
      %v505 = vtanh.pop %v489
      %v506 = vtanh.pop %v490
      %v507 = vtanh.pop %v491
      %v508 = vtanh.pop %v492
      %v509 = vtanh.pop %v493
      %v510 = vpack.c.bf16 %v495, %v494
      %v511 = vpack.c.bf16 %v497, %v496
      %v512 = vpack.c.bf16 %v499, %v498
      %v513 = vpack.c.bf16 %v501, %v500
      %v514 = vpack.c.bf16 %v503, %v502
      %v515 = vpack.c.bf16 %v505, %v504
      %v516 = vpack.c.bf16 %v507, %v506
      %v517 = vpack.c.bf16 %v509, %v508
      %v518 = vld [vmem:[%s2] sm:$0xf]
      %v519 = vld [vmem:[%s2 + $0x4] sm:$0xf]
      %v520 = vld [vmem:[%s2 + $0x8] sm:$0xf]
      %v521 = vld [vmem:[%s2 + $0xc] sm:$0xf]
      %v522 = vld [vmem:[%s2 + $0x10] sm:$0xf]
      %v523 = vld [vmem:[%s2 + $0x14] sm:$0xf]
      %v524 = vld [vmem:[%s2 + $0x18] sm:$0xf]
      %v525 = vld [vmem:[%s2 + $0x1c] sm:$0xf]
      %v526 = vld [vmem:[%s2 + $0x20] sm:$0xf]
      %v527 = vld [vmem:[%s2 + $0x24] sm:$0xf]
      %v528 = vld [vmem:[%s2 + $0x28] sm:$0xf]
      %v529 = vld [vmem:[%s2 + $0x2c] sm:$0xf]
      %v530 = vld [vmem:[%s2 + $0x30] sm:$0xf]
      %v531 = vld [vmem:[%s2 + $0x34] sm:$0xf]
      %v532 = vld [vmem:[%s2 + $0x38] sm:$0xf]
      %v533 = vld [vmem:[%s2 + $0x3c] sm:$0xf]
      %v534 = vlaneseq
      %v535 = vshrl.u32 %v534, 7
      %v536 = vsub.s32 1, %v535
      %v537 = vrot.slane %v273, %v536
      %v554 = vunpack.c.l.b16 %v518
      %v555 = vunpack.c.l.b16 %v519
      %v556 = vunpack.c.l.b16 %v520
      %v557 = vunpack.c.l.b16 %v521
      %v558 = vunpack.c.l.b16 %v522
      %v559 = vunpack.c.l.b16 %v523
      %v560 = vunpack.c.l.b16 %v524
      %v561 = vunpack.c.l.b16 %v525
      %v562 = vunpack.c.l.b16 %v526
      %v563 = vunpack.c.l.b16 %v527
      %v564 = vunpack.c.l.b16 %v528
      %v565 = vunpack.c.l.b16 %v529
      %v566 = vunpack.c.l.b16 %v530
      %v567 = vunpack.c.l.b16 %v531
      %v568 = vunpack.c.l.b16 %v532
      %v569 = vunpack.c.l.b16 %v533
      %v570 = vpack.c.b16 %v555, %v554
      %v571 = vpack.c.b16 %v557, %v556
      %v572 = vpack.c.b16 %v559, %v558
      %v573 = vpack.c.b16 %v561, %v560
      %v574 = vpack.c.b16 %v563, %v562
      %v575 = vpack.c.b16 %v565, %v564
      %v576 = vpack.c.b16 %v567, %v566
      %v577 = vpack.c.b16 %v569, %v568
      %586 = vmatprep.subr.bf16.mxu0 0
      %587 = vmatpush1.bf16.msra.mxu0 %v570
      %588 = vmatprep.subr.bf16.mxu0 0
      %589 = vmatpush1.bf16.msra.mxu0 %v571
      %590 = vmatprep.subr.bf16.mxu0 0
      %591 = vmatpush1.bf16.msra.mxu0 %v572
      %592 = vmatprep.subr.bf16.mxu0 0
      %593 = vmatpush1.bf16.msra.mxu0 %v573
      %594 = vmatprep.subr.bf16.mxu0 0
      %595 = vmatpush1.bf16.msra.mxu0 %v574
      %596 = vmatprep.subr.bf16.mxu0 0
      %597 = vmatpush1.bf16.msra.mxu0 %v575
      %598 = vmatprep.subr.bf16.mxu0 0
      %599 = vmatpush1.bf16.msra.mxu0 %v576
      %600 = vmatprep.subr.bf16.mxu0 0
      %601 = vmatpush1.bf16.msra.mxu0 %v577
      %602 = vmatprep.subr.bf16.mxu0 0
      %603 = vmatpush1.bf16.msra.mxu0 0
      %604 = vmatprep.subr.bf16.mxu0 0
      %605 = vmatpush1.bf16.msra.mxu0 0
      %606 = vmatprep.subr.bf16.mxu0 0
      %607 = vmatpush1.bf16.msra.mxu0 0
      %608 = vmatprep.subr.bf16.mxu0 0
      %609 = vmatpush1.bf16.msra.mxu0 0
      %610 = vmatprep.subr.bf16.mxu0 0
      %611 = vmatpush1.bf16.msra.mxu0 0
      %612 = vmatprep.subr.bf16.mxu0 0
      %613 = vmatpush1.bf16.msra.mxu0 0
      %614 = vmatprep.subr.bf16.mxu0 0
      %615 = vmatpush1.bf16.msra.mxu0 0
      %616 = vmatprep.subr.bf16.mxu0 0
      %617 = vmatpush1.bf16.msra.mxu0 0
      %618 = vmatprep.mubr.bf16.mxu0 0
      %619 = vmatmul.mubr.bf16.gmra.mrb[0].mxu0 %v510
      %v620 = vpop.f32.mrb[0].mxu0
      %v621 = vadd.f32 %v537, %v620
      %v622 = vpop.f32.mrb[0].mxu0
      %v623 = vpop.f32.mrb[0].mxu0
      %v624 = vadd.f32 %v537, %v623
      %v625 = vpop.f32.mrb[0].mxu0
      %626 = vmatprep.mubr.bf16.mxu0 0
      %627 = vmatmul.mubr.bf16.gmra.mrb[0].mxu0 %v511
      %v628 = vpop.f32.mrb[0].mxu0
      %v629 = vadd.f32 %v537, %v628
      %v630 = vpop.f32.mrb[0].mxu0
      %v631 = vpop.f32.mrb[0].mxu0
      %v632 = vadd.f32 %v537, %v631
      %v633 = vpop.f32.mrb[0].mxu0
      %634 = vmatprep.mubr.bf16.mxu0 0
      %635 = vmatmul.mubr.bf16.gmra.mrb[0].mxu0 %v512
      %v636 = vpop.f32.mrb[0].mxu0
      %v637 = vadd.f32 %v537, %v636
      %v638 = vpop.f32.mrb[0].mxu0
      %v639 = vpop.f32.mrb[0].mxu0
      %v640 = vadd.f32 %v537, %v639
      %v641 = vpop.f32.mrb[0].mxu0
      %642 = vmatprep.mubr.bf16.mxu0 0
      %643 = vmatmul.mubr.bf16.gmra.mrb[0].mxu0 %v513
      %v644 = vpop.f32.mrb[0].mxu0
      %v645 = vadd.f32 %v537, %v644
      %v646 = vpop.f32.mrb[0].mxu0
      %v647 = vpop.f32.mrb[0].mxu0
      %v648 = vadd.f32 %v537, %v647
      %v649 = vpop.f32.mrb[0].mxu0
      %650 = vmatprep.mubr.bf16.mxu0 0
      %651 = vmatmul.mubr.bf16.gmra.mrb[0].mxu0 %v514
      %v652 = vpop.f32.mrb[0].mxu0
      %v653 = vadd.f32 %v537, %v652
      %v654 = vpop.f32.mrb[0].mxu0
      %v655 = vpop.f32.mrb[0].mxu0
      %v656 = vadd.f32 %v537, %v655
      %v657 = vpop.f32.mrb[0].mxu0
      %658 = vmatprep.mubr.bf16.mxu0 0
      %659 = vmatmul.mubr.bf16.gmra.mrb[0].mxu0 %v515
      %v660 = vpop.f32.mrb[0].mxu0
      %v661 = vadd.f32 %v537, %v660
      %v662 = vpop.f32.mrb[0].mxu0
      %v663 = vpop.f32.mrb[0].mxu0
      %v664 = vadd.f32 %v537, %v663
      %v665 = vpop.f32.mrb[0].mxu0
      %666 = vmatprep.mubr.bf16.mxu0 0
      %667 = vmatmul.mubr.bf16.gmra.mrb[0].mxu0 %v516
      %v668 = vpop.f32.mrb[0].mxu0
      %v669 = vadd.f32 %v537, %v668
      %v670 = vpop.f32.mrb[0].mxu0
      %v671 = vpop.f32.mrb[0].mxu0
      %v672 = vadd.f32 %v537, %v671
      %v673 = vpop.f32.mrb[0].mxu0
      %674 = vmatprep.mubr.bf16.mxu0 0
      %675 = vmatmul.mubr.bf16.gmra.mrb[0].mxu0 %v517
      %v676 = vpop.f32.mrb[0].mxu0
      %v677 = vadd.f32 %v537, %v676
      %v678 = vpop.f32.mrb[0].mxu0
      %v679 = vpop.f32.mrb[0].mxu0
      %v680 = vadd.f32 %v537, %v679
      %v681 = vpop.f32.mrb[0].mxu0
      %682 = vdwg.mxu0
      %v683 = vtanh.pop %v621
      %v684 = vtanh.pop %v624
      %v685 = vtanh.pop %v629
      %v686 = vtanh.pop %v632
      %v687 = vtanh.pop %v637
      %v688 = vtanh.pop %v640
      %v689 = vtanh.pop %v645
      %v690 = vtanh.pop %v648
      %v691 = vtanh.pop %v653
      %v692 = vtanh.pop %v656
      %v693 = vtanh.pop %v661
      %v694 = vtanh.pop %v664
      %v695 = vtanh.pop %v669
      %v696 = vtanh.pop %v672
      %v697 = vtanh.pop %v677
      %v698 = vtanh.pop %v680
      %v699 = vpack.c.bf16 %v684, %v683
      %v700 = vpack.c.bf16 %v686, %v685
      %v701 = vpack.c.bf16 %v688, %v687
      %v702 = vpack.c.bf16 %v690, %v689
      %v703 = vpack.c.bf16 %v692, %v691
      %v704 = vpack.c.bf16 %v694, %v693
      %v705 = vpack.c.bf16 %v696, %v695
      %v706 = vpack.c.bf16 %v698, %v697
      %s707 = scalar_lea.vmem %s2, 64
      %v708 = vld [vmem:[%s707] sm:$0xf]
      %v709 = vld [vmem:[%s707 + $0x4] sm:$0xf]
      %v710 = vld [vmem:[%s707 + $0x8] sm:$0xf]
      %v711 = vld [vmem:[%s707 + $0xc] sm:$0xf]
      %v712 = vld [vmem:[%s707 + $0x10] sm:$0xf]
      %v713 = vld [vmem:[%s707 + $0x14] sm:$0xf]
      %v714 = vld [vmem:[%s707 + $0x18] sm:$0xf]
      %v715 = vld [vmem:[%s707 + $0x1c] sm:$0xf]
      %v716 = vld [vmem:[%s707 + $0x20] sm:$0xf]
      %v717 = vld [vmem:[%s707 + $0x24] sm:$0xf]
      %v718 = vld [vmem:[%s707 + $0x28] sm:$0xf]
      %v719 = vld [vmem:[%s707 + $0x2c] sm:$0xf]
      %v720 = vld [vmem:[%s707 + $0x30] sm:$0xf]
      %v721 = vld [vmem:[%s707 + $0x34] sm:$0xf]
      %v722 = vld [vmem:[%s707 + $0x38] sm:$0xf]
      %v723 = vld [vmem:[%s707 + $0x3c] sm:$0xf]
      %v724 = vlaneseq
      %v725 = vshrl.u32 %v724, 7
      %v726 = vsub.s32 2, %v725
      %v727 = vrot.slane %v273, %v726
      %v744 = vunpack.c.l.b16 %v708
      %v745 = vunpack.c.l.b16 %v709
      %v746 = vunpack.c.l.b16 %v710
      %v747 = vunpack.c.l.b16 %v711
      %v748 = vunpack.c.l.b16 %v712
      %v749 = vunpack.c.l.b16 %v713
      %v750 = vunpack.c.l.b16 %v714
      %v751 = vunpack.c.l.b16 %v715
      %v752 = vunpack.c.l.b16 %v716
      %v753 = vunpack.c.l.b16 %v717
      %v754 = vunpack.c.l.b16 %v718
      %v755 = vunpack.c.l.b16 %v719
      %v756 = vunpack.c.l.b16 %v720
      %v757 = vunpack.c.l.b16 %v721
      %v758 = vunpack.c.l.b16 %v722
      %v759 = vunpack.c.l.b16 %v723
      %v760 = vpack.c.b16 %v745, %v744
      %v761 = vpack.c.b16 %v747, %v746
      %v762 = vpack.c.b16 %v749, %v748
      %v763 = vpack.c.b16 %v751, %v750
      %v764 = vpack.c.b16 %v753, %v752
      %v765 = vpack.c.b16 %v755, %v754
      %v766 = vpack.c.b16 %v757, %v756
      %v767 = vpack.c.b16 %v759, %v758
      %776 = vmatprep.subr.bf16.mxu0 0
      %777 = vmatpush1.bf16.msra.mxu0 %v760
      %778 = vmatprep.subr.bf16.mxu0 0
      %779 = vmatpush1.bf16.msra.mxu0 %v761
      %780 = vmatprep.subr.bf16.mxu0 0
      %781 = vmatpush1.bf16.msra.mxu0 %v762
      %782 = vmatprep.subr.bf16.mxu0 0
      %783 = vmatpush1.bf16.msra.mxu0 %v763
      %784 = vmatprep.subr.bf16.mxu0 0
      %785 = vmatpush1.bf16.msra.mxu0 %v764
      %786 = vmatprep.subr.bf16.mxu0 0
      %787 = vmatpush1.bf16.msra.mxu0 %v765
      %788 = vmatprep.subr.bf16.mxu0 0
      %789 = vmatpush1.bf16.msra.mxu0 %v766
      %790 = vmatprep.subr.bf16.mxu0 0
      %791 = vmatpush1.bf16.msra.mxu0 %v767
      %792 = vmatprep.subr.bf16.mxu0 0
      %793 = vmatpush1.bf16.msra.mxu0 0
      %794 = vmatprep.subr.bf16.mxu0 0
      %795 = vmatpush1.bf16.msra.mxu0 0
      %796 = vmatprep.subr.bf16.mxu0 0
      %797 = vmatpush1.bf16.msra.mxu0 0
      %798 = vmatprep.subr.bf16.mxu0 0
      %799 = vmatpush1.bf16.msra.mxu0 0
      %800 = vmatprep.subr.bf16.mxu0 0
      %801 = vmatpush1.bf16.msra.mxu0 0
      %802 = vmatprep.subr.bf16.mxu0 0
      %803 = vmatpush1.bf16.msra.mxu0 0
      %804 = vmatprep.subr.bf16.mxu0 0
      %805 = vmatpush1.bf16.msra.mxu0 0
      %806 = vmatprep.subr.bf16.mxu0 0
      %807 = vmatpush1.bf16.msra.mxu0 0
      %808 = vmatprep.mubr.bf16.mxu0 0
      %809 = vmatmul.mubr.bf16.gmra.mrb[0].mxu0 %v699
      %v810 = vpop.f32.mrb[0].mxu0
      %v811 = vadd.f32 %v727, %v810
      %v812 = vpop.f32.mrb[0].mxu0
      %v813 = vpop.f32.mrb[0].mxu0
      %v814 = vadd.f32 %v727, %v813
      %v815 = vpop.f32.mrb[0].mxu0
      %816 = vmatprep.mubr.bf16.mxu0 0
      %817 = vmatmul.mubr.bf16.gmra.mrb[0].mxu0 %v700
      %v818 = vpop.f32.mrb[0].mxu0
      %v819 = vadd.f32 %v727, %v818
      %v820 = vpop.f32.mrb[0].mxu0
      %v821 = vpop.f32.mrb[0].mxu0
      %v822 = vadd.f32 %v727, %v821
      %v823 = vpop.f32.mrb[0].mxu0
      %824 = vmatprep.mubr.bf16.mxu0 0
      %825 = vmatmul.mubr.bf16.gmra.mrb[0].mxu0 %v701
      %v826 = vpop.f32.mrb[0].mxu0
      %v827 = vadd.f32 %v727, %v826
      %v828 = vpop.f32.mrb[0].mxu0
      %v829 = vpop.f32.mrb[0].mxu0
      %v830 = vadd.f32 %v727, %v829
      %v831 = vpop.f32.mrb[0].mxu0
      %832 = vmatprep.mubr.bf16.mxu0 0
      %833 = vmatmul.mubr.bf16.gmra.mrb[0].mxu0 %v702
      %v834 = vpop.f32.mrb[0].mxu0
      %v835 = vadd.f32 %v727, %v834
      %v836 = vpop.f32.mrb[0].mxu0
      %v837 = vpop.f32.mrb[0].mxu0
      %v838 = vadd.f32 %v727, %v837
      %v839 = vpop.f32.mrb[0].mxu0
      %840 = vmatprep.mubr.bf16.mxu0 0
      %841 = vmatmul.mubr.bf16.gmra.mrb[0].mxu0 %v703
      %v842 = vpop.f32.mrb[0].mxu0
      %v843 = vadd.f32 %v727, %v842
      %v844 = vpop.f32.mrb[0].mxu0
      %v845 = vpop.f32.mrb[0].mxu0
      %v846 = vadd.f32 %v727, %v845
      %v847 = vpop.f32.mrb[0].mxu0
      %848 = vmatprep.mubr.bf16.mxu0 0
      %849 = vmatmul.mubr.bf16.gmra.mrb[0].mxu0 %v704
      %v850 = vpop.f32.mrb[0].mxu0
      %v851 = vadd.f32 %v727, %v850
      %v852 = vpop.f32.mrb[0].mxu0
      %v853 = vpop.f32.mrb[0].mxu0
      %v854 = vadd.f32 %v727, %v853
      %v855 = vpop.f32.mrb[0].mxu0
      %856 = vmatprep.mubr.bf16.mxu0 0
      %857 = vmatmul.mubr.bf16.gmra.mrb[0].mxu0 %v705
      %v858 = vpop.f32.mrb[0].mxu0
      %v859 = vadd.f32 %v727, %v858
      %v860 = vpop.f32.mrb[0].mxu0
      %v861 = vpop.f32.mrb[0].mxu0
      %v862 = vadd.f32 %v727, %v861
      %v863 = vpop.f32.mrb[0].mxu0
      %864 = vmatprep.mubr.bf16.mxu0 0
      %865 = vmatmul.mubr.bf16.gmra.mrb[0].mxu0 %v706
      %v866 = vpop.f32.mrb[0].mxu0
      %v867 = vadd.f32 %v727, %v866
      %v868 = vpop.f32.mrb[0].mxu0
      %v869 = vpop.f32.mrb[0].mxu0
      %v870 = vadd.f32 %v727, %v869
      %v871 = vpop.f32.mrb[0].mxu0
      %872 = vdwg.mxu0
      %v873 = vtanh.pop %v811
      %v874 = vtanh.pop %v814
      %v875 = vtanh.pop %v819
      %v876 = vtanh.pop %v822
      %v877 = vtanh.pop %v827
      %v878 = vtanh.pop %v830
      %v879 = vtanh.pop %v835
      %v880 = vtanh.pop %v838
      %v881 = vtanh.pop %v843
      %v882 = vtanh.pop %v846
      %v883 = vtanh.pop %v851
      %v884 = vtanh.pop %v854
      %v885 = vtanh.pop %v859
      %v886 = vtanh.pop %v862
      %v887 = vtanh.pop %v867
      %v888 = vtanh.pop %v870
      %v889 = vpack.c.bf16 %v874, %v873
      %v890 = vpack.c.bf16 %v876, %v875
      %v891 = vpack.c.bf16 %v878, %v877
      %v892 = vpack.c.bf16 %v880, %v879
      %v893 = vpack.c.bf16 %v882, %v881
      %v894 = vpack.c.bf16 %v884, %v883
      %v895 = vpack.c.bf16 %v886, %v885
      %v896 = vpack.c.bf16 %v888, %v887
      %v897 = vld [vmem:[%s3] sm:$0xf]
      %v898 = vld [vmem:[%s3 + $0x4] sm:$0xf]
      %v899 = vld [vmem:[%s3 + $0x8] sm:$0xf]
      %v900 = vld [vmem:[%s3 + $0xc] sm:$0xf]
      %v901 = vld [vmem:[%s3 + $0x10] sm:$0xf]
      %v902 = vld [vmem:[%s3 + $0x14] sm:$0xf]
      %v903 = vld [vmem:[%s3 + $0x18] sm:$0xf]
      %v904 = vld [vmem:[%s3 + $0x1c] sm:$0xf]
      %v905 = vld [vmem:[%s3 + $0x20] sm:$0xf]
      %v906 = vld [vmem:[%s3 + $0x24] sm:$0xf]
      %v907 = vld [vmem:[%s3 + $0x28] sm:$0xf]
      %v908 = vld [vmem:[%s3 + $0x2c] sm:$0xf]
      %v909 = vld [vmem:[%s3 + $0x30] sm:$0xf]
      %v910 = vld [vmem:[%s3 + $0x34] sm:$0xf]
      %v911 = vld [vmem:[%s3 + $0x38] sm:$0xf]
      %v912 = vld [vmem:[%s3 + $0x3c] sm:$0xf]
      %v913 = vld [vmem:[%s5] sm:$0x1]
      %v915 = vlaneseq
      %v916 = vshrl.u32 %v915, 7
      %v917 = vsub.s32 0, %v916
      %v918 = vrot.slane %v913, %v917
      %v936 = vunpack.c.l.b16 %v897
      %v937 = vunpack.c.l.b16 %v898
      %v938 = vunpack.c.l.b16 %v899
      %v939 = vunpack.c.l.b16 %v900
      %v940 = vunpack.c.l.b16 %v901
      %v941 = vunpack.c.l.b16 %v902
      %v942 = vunpack.c.l.b16 %v903
      %v943 = vunpack.c.l.b16 %v904
      %v944 = vunpack.c.l.b16 %v905
      %v945 = vunpack.c.l.b16 %v906
      %v946 = vunpack.c.l.b16 %v907
      %v947 = vunpack.c.l.b16 %v908
      %v948 = vunpack.c.l.b16 %v909
      %v949 = vunpack.c.l.b16 %v910
      %v950 = vunpack.c.l.b16 %v911
      %v951 = vunpack.c.l.b16 %v912
      %v952 = vpack.c.b16 %v937, %v936
      %v953 = vpack.c.b16 %v939, %v938
      %v954 = vpack.c.b16 %v941, %v940
      %v955 = vpack.c.b16 %v943, %v942
      %v956 = vpack.c.b16 %v945, %v944
      %v957 = vpack.c.b16 %v947, %v946
      %v958 = vpack.c.b16 %v949, %v948
      %v959 = vpack.c.b16 %v951, %v950
      %968 = vmatprep.subr.bf16.mxu0 0
      %969 = vmatpush1.bf16.msra.mxu0 %v952
      %970 = vmatprep.subr.bf16.mxu0 0
      %971 = vmatpush1.bf16.msra.mxu0 %v953
      %972 = vmatprep.subr.bf16.mxu0 0
      %973 = vmatpush1.bf16.msra.mxu0 %v954
      %974 = vmatprep.subr.bf16.mxu0 0
      %975 = vmatpush1.bf16.msra.mxu0 %v955
      %976 = vmatprep.subr.bf16.mxu0 0
      %977 = vmatpush1.bf16.msra.mxu0 %v956
      %978 = vmatprep.subr.bf16.mxu0 0
      %979 = vmatpush1.bf16.msra.mxu0 %v957
      %980 = vmatprep.subr.bf16.mxu0 0
      %981 = vmatpush1.bf16.msra.mxu0 %v958
      %982 = vmatprep.subr.bf16.mxu0 0
      %983 = vmatpush1.bf16.msra.mxu0 %v959
      %984 = vmatprep.subr.bf16.mxu0 0
      %985 = vmatpush1.bf16.msra.mxu0 0
      %986 = vmatprep.subr.bf16.mxu0 0
      %987 = vmatpush1.bf16.msra.mxu0 0
      %988 = vmatprep.subr.bf16.mxu0 0
      %989 = vmatpush1.bf16.msra.mxu0 0
      %990 = vmatprep.subr.bf16.mxu0 0
      %991 = vmatpush1.bf16.msra.mxu0 0
      %992 = vmatprep.subr.bf16.mxu0 0
      %993 = vmatpush1.bf16.msra.mxu0 0
      %994 = vmatprep.subr.bf16.mxu0 0
      %995 = vmatpush1.bf16.msra.mxu0 0
      %996 = vmatprep.subr.bf16.mxu0 0
      %997 = vmatpush1.bf16.msra.mxu0 0
      %998 = vmatprep.subr.bf16.mxu0 0
      %999 = vmatpush1.bf16.msra.mxu0 0
      %1000 = vmatprep.mubr.bf16.mxu0 0
      %1001 = vmatmul.mubr.bf16.gmra.mrb[0].mxu0 %v889
      %v1002 = vpop.f32.mrb[0].mxu0
      %v1003 = vadd.f32 %v918, %v1002
      %v1004 = vpop.f32.mrb[0].mxu0
      %v1005 = vpop.f32.mrb[0].mxu0
      %v1006 = vadd.f32 %v918, %v1005
      %v1007 = vpop.f32.mrb[0].mxu0
      %1008 = vmatprep.mubr.bf16.mxu0 0
      %1009 = vmatmul.mubr.bf16.gmra.mrb[0].mxu0 %v890
      %v1010 = vpop.f32.mrb[0].mxu0
      %v1011 = vadd.f32 %v918, %v1010
      %v1012 = vpop.f32.mrb[0].mxu0
      %v1013 = vpop.f32.mrb[0].mxu0
      %v1014 = vadd.f32 %v918, %v1013
      %v1015 = vpop.f32.mrb[0].mxu0
      %1016 = vmatprep.mubr.bf16.mxu0 0
      %1017 = vmatmul.mubr.bf16.gmra.mrb[0].mxu0 %v891
      %v1018 = vpop.f32.mrb[0].mxu0
      %v1019 = vadd.f32 %v918, %v1018
      %v1020 = vpop.f32.mrb[0].mxu0
      %v1021 = vpop.f32.mrb[0].mxu0
      %v1022 = vadd.f32 %v918, %v1021
      %v1023 = vpop.f32.mrb[0].mxu0
      %1024 = vmatprep.mubr.bf16.mxu0 0
      %1025 = vmatmul.mubr.bf16.gmra.mrb[0].mxu0 %v892
      %v1026 = vpop.f32.mrb[0].mxu0
      %v1027 = vadd.f32 %v918, %v1026
      %v1028 = vpop.f32.mrb[0].mxu0
      %v1029 = vpop.f32.mrb[0].mxu0
      %v1030 = vadd.f32 %v918, %v1029
      %v1031 = vpop.f32.mrb[0].mxu0
      %1032 = vmatprep.mubr.bf16.mxu0 0
      %1033 = vmatmul.mubr.bf16.gmra.mrb[0].mxu0 %v893
      %v1034 = vpop.f32.mrb[0].mxu0
      %v1035 = vadd.f32 %v918, %v1034
      %v1036 = vpop.f32.mrb[0].mxu0
      %v1037 = vpop.f32.mrb[0].mxu0
      %v1038 = vadd.f32 %v918, %v1037
      %v1039 = vpop.f32.mrb[0].mxu0
      %1040 = vmatprep.mubr.bf16.mxu0 0
      %1041 = vmatmul.mubr.bf16.gmra.mrb[0].mxu0 %v894
      %v1042 = vpop.f32.mrb[0].mxu0
      %v1043 = vadd.f32 %v918, %v1042
      %v1044 = vpop.f32.mrb[0].mxu0
      %v1045 = vpop.f32.mrb[0].mxu0
      %v1046 = vadd.f32 %v918, %v1045
      %v1047 = vpop.f32.mrb[0].mxu0
      %1048 = vmatprep.mubr.bf16.mxu0 0
      %1049 = vmatmul.mubr.bf16.gmra.mrb[0].mxu0 %v895
      %v1050 = vpop.f32.mrb[0].mxu0
      %v1051 = vadd.f32 %v918, %v1050
      %v1052 = vpop.f32.mrb[0].mxu0
      %v1053 = vpop.f32.mrb[0].mxu0
      %v1054 = vadd.f32 %v918, %v1053
      %v1055 = vpop.f32.mrb[0].mxu0
      %1056 = vmatprep.mubr.bf16.mxu0 0
      %1057 = vmatmul.mubr.bf16.gmra.mrb[0].mxu0 %v896
      %v1058 = vpop.f32.mrb[0].mxu0
      %v1059 = vadd.f32 %v918, %v1058
      %v1060 = vpop.f32.mrb[0].mxu0
      %v1061 = vpop.f32.mrb[0].mxu0
      %v1062 = vadd.f32 %v918, %v1061
      %v1063 = vpop.f32.mrb[0].mxu0
      %1064 = vdwg.mxu0
      %vm1065 = vcmask 64512
      %1066 = vst.msk [vmem:[%s253] sm:$0xff] %vm1065, %v1003
      %1067 = vst.msk [vmem:[%s253 + $0x8] sm:$0xff] %vm1065, %v1006
      %1068 = vst.msk [vmem:[%s253 + $0x10] sm:$0xff] %vm1065, %v1011
      %1069 = vst.msk [vmem:[%s253 + $0x18] sm:$0xff] %vm1065, %v1014
      %1070 = vst.msk [vmem:[%s253 + $0x20] sm:$0xff] %vm1065, %v1019
      %1071 = vst.msk [vmem:[%s253 + $0x28] sm:$0xff] %vm1065, %v1022
      %1072 = vst.msk [vmem:[%s253 + $0x30] sm:$0xff] %vm1065, %v1027
      %1073 = vst.msk [vmem:[%s253 + $0x38] sm:$0xff] %vm1065, %v1030
      %1074 = vst.msk [vmem:[%s253 + $0x40] sm:$0xff] %vm1065, %v1035
      %1075 = vst.msk [vmem:[%s253 + $0x48] sm:$0xff] %vm1065, %v1038
      %1076 = vst.msk [vmem:[%s253 + $0x50] sm:$0xff] %vm1065, %v1043
      %1077 = vst.msk [vmem:[%s253 + $0x58] sm:$0xff] %vm1065, %v1046
      %1078 = vst.msk [vmem:[%s253 + $0x60] sm:$0xff] %vm1065, %v1051
      %1079 = vst.msk [vmem:[%s253 + $0x68] sm:$0xff] %vm1065, %v1054
      %1080 = vst.msk [vmem:[%s253 + $0x70] sm:$0xff] %vm1065, %v1059
      %1081 = vst.msk [vmem:[%s253 + $0x78] sm:$0xff] %vm1065, %v1062
      %s1082 = smul.u32 16, %s17
      %p1083 = scmp.lt.s32.totalorder %s1082, 31
      %s1084 = scalar_select %p1083, %s1082, 31
      %s1085 = smul.addr %s1084, 8
      %s1086 = scalar_lea.vmem %s6, %s1085
      // Predicated region
      $region45: #{mlp_forward.1} parent=43 // pred_check
        %p1087 = pneg %p166
      $region46: #{mlp_forward.1} parent=43 // pred_check_branch
        %1089 = sbr.rel (%p1087) target = $region48
      $region47: #{mlp_forward.1} parent=43 // pred_region
        %s1090 = smul.u32 16, %s17
      $region48: #{mlp_forward.1} parent=43 // pred_fallthru
        _
    $region44: #{mlp_forward.1} parent=5 // pred_fallthru
      _
    %p1091 = scmp.le.s32.totalorder 2, %s12
    // Predicated region
    $region49: #{mlp_forward.1} parent=5 // pred_check
      %p1092 = pneg %p1091
    $region50: #{mlp_forward.1} parent=5 // pred_check_branch
      %1094 = sbr.rel (%p1092) target = $region52
    $region51: #{mlp_forward.1} parent=5 // pred_region
      %s1095 = ssub.s32 %s12, 2
      // Predicated region
      $region53: #{mlp_forward.1} parent=51 // pred_check
        %p1096 = pneg %p172
      $region54: #{mlp_forward.1} parent=51 // pred_check_branch
        %1098 = sbr.rel (%p1096) target = $region56
      $region55: #{mlp_forward.1} parent=51 // pred_region
        %s1099 = smul.u32 16, %s18
        %p1100 = scmp.lt.s32.totalorder %s1099, 31
        %s1101 = scalar_select %p1100, %s1099, 31
        %s1102 = smul.addr %s1101, 8
        %s1103 = scalar_lea.vmem %s6, %s1102
      $region56: #{mlp_forward.1} parent=51 // pred_fallthru
        _
    $region52: #{mlp_forward.1} parent=5 // pred_fallthru
      _
  $region6: #{mlp_forward.1} parent=0 // loop_footer
    %s16 = sadd.s32 1, %s12
  $region7: #{mlp_forward.1} parent=0 // loop_footer_branch
    %11 = sbr.rel target = $region3
  $region8: #{mlp_forward.1} parent=0 // loop_exit
    _

</llo_original>
